<compile_context>
chip_gen: v7x
topology: tpu7x:2x2x1
jax: 0.10.0
libtpu: 0.0.40
codegen_flags: <defaults>
</compile_context>

<pallas_src>
import functools

import jax
import jax.numpy as jnp
from jax.experimental import pallas as pl
from jax.experimental.pallas import tpu as pltpu

LANES = 128  # TPU vreg lane width; samples are packed 128 per row.


def _cdiv(a, b):
    return (a + b - 1) // b


def _round_up(a, b):
    return _cdiv(a, b) * b


def ridge_kernel(w_ref, xt_ref, o_ref, *, k):
    # w_ref : SMEM (k,) f32 scalars (only w[0:3] of the module are ever used).
    # xt_ref: VMEM (k, TILE_R, 128) in the caller's dtype (feature-major planes).
    # o_ref : VMEM (TILE_R, 128) f32 -- dense, full-width unmasked stores.
    # Pure VALU FMA chain; in-kernel upcast keeps bf16 inputs cheap on HBM
    # while computing in f32 (required on v5e, harmless elsewhere).
    acc = xt_ref[0].astype(jnp.float32) * w_ref[0]
    for j in range(1, k):
        acc = acc + xt_ref[j].astype(jnp.float32) * w_ref[j]
    o_ref[...] = acc


def _choose_tile_rows(n_rows, max_tile_rows, min_tiles, sublane_mult):
    """Balanced row-tile size: >= min_tiles grid steps, tail-balanced, aligned."""
    max_tile_rows = max(sublane_mult, (max_tile_rows // sublane_mult) * sublane_mult)
    num_tiles = max(min_tiles, _cdiv(n_rows, max_tile_rows))
    tile_r = min(max_tile_rows, _round_up(_cdiv(n_rows, num_tiles), sublane_mult))
    return max(sublane_mult, tile_r)


def _ridge_call(xt_slab, w_used, n_valid, *, tile_r):
    """xt_slab: (k, R_pad, 128) feature-major planes; returns (n_valid,) f32."""
    k, r_pad, lanes = xt_slab.shape
    grid = r_pad // tile_r
    x_itemsize = jnp.dtype(xt_slab.dtype).itemsize
    # Double-buffered working set: 2 x input tile + 2 x output tile (+ slack).
    working = 2 * (k * tile_r * lanes * x_itemsize) + 2 * (tile_r * lanes * 4)
    vmem_limit = int(max(working + (4 << 20), 16 << 20))

    out = pl.pallas_call(
        functools.partial(ridge_kernel, k=k),
        out_shape=jax.ShapeDtypeStruct((r_pad, lanes), jnp.float32),
        grid=(grid,),
        in_specs=[
            # Weights: tiny, scalar-read -> SMEM, resident for the whole grid.
            pl.BlockSpec(memory_space=pltpu.MemorySpace.SMEM),
            # Leading dim k(=3) equals the full array dim -> exempt from the
            # (8,128) rule; last two dims are (tile_r multiple of 8/16, 128).
            pl.BlockSpec((k, tile_r, lanes), lambda i: (0, i, 0)),
        ],
        out_specs=pl.BlockSpec((tile_r, lanes), lambda i: (i, 0)),
        compiler_params=pltpu.CompilerParams(
            dimension_semantics=("parallel",),  # megacore/TC-shardable row tiles
            vmem_limit_bytes=vmem_limit,
        ),
    )(w_used, xt_slab)
    return out.reshape(-1)[:n_valid]


def ridge_forward(x, w, *, num_used=3, max_tile_rows=2048, min_tiles=2):
    """x: (N, F) f32/bf16, w: (F,) -> (N,) f32 = sum_{j<3} x[:, j] * w[j].

    Matches the module's forward (bias b and features 3..11 are never read).
    max_tile_rows=2048 -> ~262K samples (~3 MiB f32) streamed per grid step.
    """
    N, F = x.shape
    k = min(num_used, F)
    assert k >= 1, "need at least one feature"

    x_itemsize = jnp.dtype(x.dtype).itemsize
    sublane_mult = 8 * max(1, 4 // x_itemsize)          # 8 for f32, 16 for bf16
    n_rows = _cdiv(N, LANES)
    tile_r = _choose_tile_rows(n_rows, max_tile_rows, min_tiles, sublane_mult)
    r_pad = _round_up(n_rows, tile_r)
    n_pad = r_pad * LANES

    # Layout plumbing (one-time, wrapper-side): gather the 3 used columns,
    # transpose to feature-major, zero-pad the sample tail, fold samples into
    # dense (rows, 128) planes.  Zero padding contributes nothing and the tail
    # is sliced off below.  Input dtype is preserved (bf16 stays bf16).
    xt = jnp.swapaxes(x[:, :k], 0, 1)
    xt = jnp.pad(xt, ((0, 0), (0, n_pad - N))).reshape(k, r_pad, LANES)
    w_used = jnp.asarray(w, jnp.float32)[:k]
    return _ridge_call(xt, w_used, N, tile_r=tile_r)


def ridge_forward_feature_major(x_fm, w, *, num_used=3, max_tile_rows=2048,
                                min_tiles=2):
    """Same computation, but x_fm is already feature-major (F, N): no transpose copy."""
    F, N = x_fm.shape
    k = min(num_used, F)
    assert k >= 1, "need at least one feature"

    x_itemsize = jnp.dtype(x_fm.dtype).itemsize
    sublane_mult = 8 * max(1, 4 // x_itemsize)
    n_rows = _cdiv(N, LANES)
    tile_r = _choose_tile_rows(n_rows, max_tile_rows, min_tiles, sublane_mult)
    r_pad = _round_up(n_rows, tile_r)
    n_pad = r_pad * LANES

    xt = jnp.pad(x_fm[:k, :], ((0, 0), (0, n_pad - N))).reshape(k, r_pad, LANES)
    w_used = jnp.asarray(w, jnp.float32)[:k]
    return _ridge_call(xt, w_used, N, tile_r=tile_r)


if __name__ == "__main__":
    key = jax.random.PRNGKey(0)
    # Shapes consistent with the module: n=100 samples, 12 spline features
    # (two 6-df cubic B-spline bases hstacked).
    N, F = 100, 12
    x = jax.random.uniform(key, (N, F), dtype=jnp.float32, minval=0.0, maxval=10.0)

    # Parameters exactly as in RidgeRegression.__init__ (zeros).
    w = jnp.zeros((F,), dtype=jnp.float32)
    b = jnp.zeros((1,), dtype=jnp.float32)  # noqa: F841  present in module, unused in forward

    out = ridge_forward(x, w)
    jax.block_until_ready(out)
    assert out.shape == (N,) and out.dtype == jnp.float32
    assert jnp.allclose(out, x[:, :3] @ w[:3], atol=1e-6)

    # Non-trivial weights: verifies the SMEM-scalar FMA path.
    w_nz = jnp.arange(F, dtype=jnp.float32) * 0.1
    out_nz = ridge_forward(x, w_nz)
    jax.block_until_ready(out_nz)
    ref_nz = x[:, :3] @ w_nz[:3]
    assert jnp.allclose(out_nz, ref_nz, atol=1e-5)

    # Feature-major entry point (skips the wrapper-side transpose copy).
    out_fm = ridge_forward_feature_major(jnp.swapaxes(x, 0, 1), w_nz)
    jax.block_until_ready(out_fm)
    assert jnp.allclose(out_fm, ref_nz, atol=1e-5)

    # bf16 input path (kernel upcasts in VMEM; HBM traffic halved).
    x_bf16 = x.astype(jnp.bfloat16)
    out_bf16 = ridge_forward(x_bf16, w_nz)
    jax.block_until_ready(out_bf16)
    ref_bf16 = x_bf16.astype(jnp.float32)[:, :3] @ w_nz[:3]
    assert jnp.allclose(out_bf16, ref_bf16, atol=1e-2, rtol=1e-2)

    print("KERNEL_OK")
</pallas_src>

<mosaic_0001>
module attributes {stable_mosaic.version = 11 : i64} {
  func.func @ridge_kernel(%arg0: i32, %arg1: memref<3xf32, #tpu.memory_space<smem>>, %arg2: memref<3x8x128xf32, #tpu.memory_space<vmem>>, %arg3: memref<8x128xf32, #tpu.memory_space<vmem>>) attributes {dimension_semantics = [#tpu.dimension_semantics<parallel>], iteration_bounds = array<i64: 1>, scalar_prefetch = 0 : i64, scratch_operands = 0 : i64, tpu.core_type = #tpu.core_type<tc>, window_params = [{transform_indices = @transform_0, window_bounds = array<i64: 3>}, {transform_indices = @transform_1, window_bounds = array<i64: 3, 8, 128>}, {transform_indices = @transform_2, window_bounds = array<i64: 8, 128>}]} {
    %c0 = arith.constant 0 : index
    %c0_0 = arith.constant 0 : index
    %c0_1 = arith.constant 0 : index
    %0 = vector.load %arg2[%c0, %c0_0, %c0_1] : memref<3x8x128xf32, #tpu.memory_space<vmem>>, vector<1x8x128xf32>
    %1 = vector.shape_cast %0 : vector<1x8x128xf32> to vector<8x128xf32>
    %c0_2 = arith.constant 0 : index
    %2 = memref.load %arg1[%c0_2] : memref<3xf32, #tpu.memory_space<smem>>
    %3 = vector.broadcast %2 : f32 to vector<8x128xf32>
    %4 = arith.mulf %1, %3 : vector<8x128xf32>
    %c1 = arith.constant 1 : index
    %c0_3 = arith.constant 0 : index
    %c0_4 = arith.constant 0 : index
    %5 = vector.load %arg2[%c1, %c0_3, %c0_4] : memref<3x8x128xf32, #tpu.memory_space<vmem>>, vector<1x8x128xf32>
    %6 = vector.shape_cast %5 : vector<1x8x128xf32> to vector<8x128xf32>
    %c1_5 = arith.constant 1 : index
    %7 = memref.load %arg1[%c1_5] : memref<3xf32, #tpu.memory_space<smem>>
    %8 = vector.broadcast %7 : f32 to vector<8x128xf32>
    %9 = arith.mulf %6, %8 : vector<8x128xf32>
    %10 = arith.addf %4, %9 : vector<8x128xf32>
    %c2 = arith.constant 2 : index
    %c0_6 = arith.constant 0 : index
    %c0_7 = arith.constant 0 : index
    %11 = vector.load %arg2[%c2, %c0_6, %c0_7] : memref<3x8x128xf32, #tpu.memory_space<vmem>>, vector<1x8x128xf32>
    %12 = vector.shape_cast %11 : vector<1x8x128xf32> to vector<8x128xf32>
    %c2_8 = arith.constant 2 : index
    %13 = memref.load %arg1[%c2_8] : memref<3xf32, #tpu.memory_space<smem>>
    %14 = vector.broadcast %13 : f32 to vector<8x128xf32>
    %15 = arith.mulf %12, %14 : vector<8x128xf32>
    %16 = arith.addf %10, %15 : vector<8x128xf32>
    %c0_9 = arith.constant 0 : index
    %c0_10 = arith.constant 0 : index
    %17 = vector.load %arg3[%c0_9, %c0_10] : memref<8x128xf32, #tpu.memory_space<vmem>>, vector<8x128xf32>
    tpu.vector_store %arg3[%c0_9, %c0_10], %16 {strides = array<i32>} : memref<8x128xf32, #tpu.memory_space<vmem>>, vector<8x128xf32>,
    return
  }
  func.func @transform_0(%arg0: i32) -> i32 {
    %c0_i32 = arith.constant 0 : i32
    %c0_i32_0 = arith.constant 0 : i32
    return %c0_i32 : i32
  }
  func.func @transform_1(%arg0: i32) -> (i32, i32, i32) {
    %c0_i32 = arith.constant 0 : i32
    %c0_i32_0 = arith.constant 0 : i32
    %c0_i32_1 = arith.constant 0 : i32
    return %c0_i32, %arg0, %c0_i32_0 : i32, i32, i32
  }
  func.func @transform_2(%arg0: i32) -> (i32, i32) {
    %c0_i32 = arith.constant 0 : i32
    %c0_i32_0 = arith.constant 0 : i32
    return %arg0, %c0_i32 : i32, i32
  }
}

</mosaic_0001>

<llo_original>
// kernel: tpu_custom_call.1
$region0: #{tpu_custom_call.1}
  #allocation0 [shape = 'u32[]', space=smem, size = 0x4, offset = 0x4, fixed_abs, tag = 'smem constant byte address 0x4 - core index']
  #allocation1 [shape = 'u32[144,128]{1,0:T(1,128)}', space=vmem, size = 0x12000, scoped, tag = 'internal scratch']
  %s0 = inlined_call_operand.hbm [shape: f32[3], index: 0, kind: input, shape index: {}]
  %s1 = inlined_call_operand.hbm [shape: f32[3,8,128], index: 1, kind: input, shape index: {}]
  %s2 = inlined_call_operand.hbm [shape: f32[8,128], index: 2, kind: output, shape index: {}]
  %s3 = sld [smem:[#allocation0]]
  $region26: #{tpu_custom_call.1} parent=0
    _
  %s5 = ssub.s32 1, %s3
  %s6 = scalar_select 0, %s5, %s3
  $region1: #{tpu_custom_call.1} parent=0
    #allocation2 [shape = 'u8[512]{0}', space=smem, size = 0x200, scoped, tag = 'input window, operand 0, single buffered']
    #allocation3 [shape = 's32[1]{0}', space=sflag, size = 0x4, scoped, tag = 'scoped memory for tpu_custom_call.1']
    #allocation4 [shape = 's32[1]{0}', space=sflag, size = 0x4, scoped, tag = 'scoped memory for tpu_custom_call.1']
    #allocation5 [shape = 's32[1]{0}', space=sflag, size = 0x4, scoped, tag = 'scoped memory for tpu_custom_call.1']
    #allocation6 [shape = 'u8[12288]{0}', space=vmem, size = 0x3000, scoped, tag = 'input window, operand 1, single buffered']
    #allocation7 [shape = 'u8[4096]{0}', space=vmem, size = 0x1000, scoped, tag = 'output window, operand 0, single buffered']
    %7 = vsyncpa [#allocation5], 0
    %8 = vsyncpa [#allocation3], 0
    %9 = vsyncpa [#allocation4], 0
    // Predicated region
    $region2: #{tpu_custom_call.1} parent=1 // pred_check
      _
    $region3: #{tpu_custom_call.1} parent=1 // pred_check_branch
      %11 = sbr.rel (0) target = $region5
    $region4: #{tpu_custom_call.1} parent=1 // pred_region
      %s13 = ssub.s32 16, 16
      %14 = vsyncadd [#allocation5], %s13
      %17 = dma.hbm_to_smem %s0, 16, [#allocation2], [#allocation5]
    $region5: #{tpu_custom_call.1} parent=1 // pred_fallthru
      _
    // Predicated region
    $region6: #{tpu_custom_call.1} parent=1 // pred_check
      _
    $region7: #{tpu_custom_call.1} parent=1 // pred_check_branch
      %19 = sbr.rel (0) target = $region9
    $region8: #{tpu_custom_call.1} parent=1 // pred_region
      %s21 = ssub.s32 384, 384
      %22 = vsyncadd [#allocation3], %s21
      %s23 = sshll.u32 [#allocation6], 4
      %s24 = int_to_ptr.vmem [resolvable:$true] %s23
      %29 = dma.hbm_to_vmem [thread:$0]  %s1, 384, %s24, [#allocation3], 128, 128, 8
    $region9: #{tpu_custom_call.1} parent=1 // pred_fallthru
      _
    // Predicated region
    $region10: #{tpu_custom_call.1} parent=1 // pred_check
      _
    $region11: #{tpu_custom_call.1} parent=1 // pred_check_branch
      %31 = sbr.rel (0) target = $region13
    $region12: #{tpu_custom_call.1} parent=1 // pred_region
      %32 = dma.done [#allocation5], 16
    $region13: #{tpu_custom_call.1} parent=1 // pred_fallthru
      _
    // Predicated region
    $region14: #{tpu_custom_call.1} parent=1 // pred_check
      _
    $region15: #{tpu_custom_call.1} parent=1 // pred_check_branch
      %34 = sbr.rel (0) target = $region17
    $region16: #{tpu_custom_call.1} parent=1 // pred_region
      %35 = dma.done [#allocation3], 384
    $region17: #{tpu_custom_call.1} parent=1 // pred_fallthru
      _
    %36 = sfence
    %v37 = vld [vmem:[#allocation6] sm:$0xff]
    %s38 = sld [smem:[#allocation2]]
    %v39 = vstv %s38
    %v40 = vmul.f32 %v37, %v39
    %s41 = scalar_lea.vmem [#allocation6], 8
    %v42 = vld [vmem:[%s41] sm:$0xff]
    %s43 = sld [smem:[#allocation2 + $0x1]]
    %v44 = vstv %s43
    %v45 = vmul.f32 %v42, %v44
    %v46 = vadd.f32 %v40, %v45
    %s47 = scalar_lea.vmem [#allocation6], 16
    %v48 = vld [vmem:[%s47] sm:$0xff]
    %s49 = sld [smem:[#allocation2 + $0x2]]
    %v50 = vstv %s49
    %v51 = vmul.f32 %v48, %v50
    %v52 = vadd.f32 %v46, %v51
    %53 = vst [vmem:[#allocation7] sm:$0xff] %v52
    // Predicated region
    $region18: #{tpu_custom_call.1} parent=1 // pred_check
      _
    $region19: #{tpu_custom_call.1} parent=1 // pred_check_branch
      %55 = sbr.rel (0) target = $region21
    $region20: #{tpu_custom_call.1} parent=1 // pred_region
      %s57 = ssub.s32 128, 128
      %58 = vsyncadd [#allocation4], %s57
      %s60 = sshll.u32 [#allocation7], 4
      %s61 = int_to_ptr.vmem [resolvable:$true] %s60
      %63 = dma.vmem_to_hbm [thread:$0]  %s61, 128, %s2, [#allocation4]
    $region21: #{tpu_custom_call.1} parent=1 // pred_fallthru
      _
    // Predicated region
    $region22: #{tpu_custom_call.1} parent=1 // pred_check
      _
    $region23: #{tpu_custom_call.1} parent=1 // pred_check_branch
      %65 = sbr.rel (0) target = $region25
    $region24: #{tpu_custom_call.1} parent=1 // pred_region
      %66 = dma.done [#allocation4], 128
    $region25: #{tpu_custom_call.1} parent=1 // pred_fallthru
      _
    %67 = vsyncpa [#allocation3], 1
    %68 = vsyncpa [#allocation4], 1
    %69 = vsyncpa [#allocation5], 1

</llo_original>
